<compile_context>
chip_gen: v7x
topology: tpu7x:2x2x1
jax: 0.10.0
libtpu: 0.0.40
codegen_flags: <defaults>
</compile_context>

<pallas_src>
import functools

import numpy as np
import jax
import jax.numpy as jnp
from jax.experimental import pallas as pl
from jax.experimental.pallas import tpu as pltpu

GAMMA = 5.5
BALANCE_INDEX = 2
LANE = 128
# smooth=1e-5 is only range-checked in __init__ and unused in forward.
# alpha is unused in forward.


def _int_pow(x, n):
    """x**n for small static integer n >= 1 via a multiply chain."""
    result = None
    p = x
    while n:
        if n & 1:
            result = p if result is None else result * p
        n >>= 1
        if n:
            p = p * p
    return result


def _pow_gamma(base, gamma):
    """base**gamma without the log+exp lowering for (half-)integer gamma."""
    if gamma == 0:
        return jnp.ones_like(base)
    g2 = 2.0 * float(gamma)
    if g2 > 0 and float(g2).is_integer():
        n = int(gamma)                       # integer part
        has_half = (g2 - 2 * n) == 1.0
        w = _int_pow(base, n) if n >= 1 else None
        if has_half:
            s = jnp.sqrt(base)
            w = s if w is None else w * s
        return w
    return jnp.power(base, gamma)            # generic fallback


def _focal_kernel(logit_ref, tgt_ref, loss_ref, cnt_ref, *,
                  num_class, gamma, balance_index, g, ts, partial_last):
    j = pl.program_id(1)

    @pl.when(j == 0)
    def _init():
        loss_ref[...] = jnp.zeros_like(loss_ref)
        cnt_ref[...] = jnp.zeros_like(cnt_ref)

    # ---- lane-dense focal loss over a (ts, 128)-pixel tile -----------------
    # Load each class tile once; reuse it for both the max and the exp pass.
    xs = [logit_ref[0, c].astype(jnp.float32) for c in range(num_class)]

    m = xs[0]
    for c in range(1, num_class):
        m = jnp.maximum(m, xs[c])

    t = tgt_ref[0]                                   # (ts, 128) int32
    sum_ex = None
    xs_t = jnp.zeros_like(m)                         # x_target - m
    for c in range(num_class):
        xc = xs[c] - m
        e = jnp.exp(xc)
        sum_ex = e if sum_ex is None else sum_ex + e
        xs_t = jnp.where(t == c, xc, xs_t)

    ce = jnp.log(sum_ex) - xs_t                      # -log_softmax at target
    pt = jnp.exp(-ce)                                # softmax prob at target
    base = jnp.maximum(1.0 - pt, 0.0)                # pt may round above 1
    focal = _pow_gamma(base, gamma) * ce             # (1 - pt)^gamma * ce
    pos = jnp.where(t != balance_index, 1.0, 0.0)

    def _accumulate(focal_t, pos_t):
        # Fold the (ts, 128) tile onto the resident (8, 128) output block.
        q, r = divmod(ts, 8)
        if q > 0:
            loss_ref[0] += jnp.sum(focal_t[: 8 * q].reshape(q, 8, LANE), axis=0)
            cnt_ref[0] += jnp.sum(pos_t[: 8 * q].reshape(q, 8, LANE), axis=0)
        if r > 0:    # only on the tiny single-tile path (ts == g, g % 8 != 0)
            loss_ref[0, :r] += focal_t[8 * q:]
            cnt_ref[0, :r] += pos_t[8 * q:]

    if partial_last:
        # Only the last pixel tile can be partial; keep the mask off the
        # interior (hot-path) tiles entirely.
        last = pl.num_programs(1) - 1

        @pl.when(j < last)
        def _full_tile():
            _accumulate(focal, pos)

        @pl.when(j == last)
        def _edge_tile():
            row = jax.lax.broadcasted_iota(jnp.int32, (ts, LANE), 0)
            valid = (j * ts + row) < g
            _accumulate(jnp.where(valid, focal, 0.0),
                        jnp.where(valid, pos, 0.0))
    else:
        _accumulate(focal, pos)


def focal_loss_custom(logit, target, *, gamma=GAMMA, balance_index=BALANCE_INDEX,
                      size_average=False, ts_max=512):
    """Forward of FocalLossCustom.

    logit:  (N, C, H, W) float32/bfloat16 (or already-flat (M, C))
    target: (N, 1, H, W) / (N, H, W) / flat integer class ids
    """
    # --- present logits as (N, C, HW) in native NCHW order (free reshape) ---
    if logit.ndim > 2:
        n_img, num_class = int(logit.shape[0]), int(logit.shape[1])
        hw = int(np.prod(logit.shape[2:]))
        lg = logit.reshape(n_img, num_class, hw)
    else:
        # (M, C) fallback: one small transpose so classes sit on their own axis.
        num_class = int(logit.shape[-1])
        lg2 = logit.reshape(-1, num_class)
        n_img, hw = 1, int(lg2.shape[0])
        lg = jnp.transpose(lg2, (1, 0)).reshape(1, num_class, hw)
    # Logits dtype is passed through (bf16 inputs stay bf16 over HBM, upcast
    # per class tile in the kernel).
    # TODO(synk): optionally cast f32 logits to bf16 / targets to int8 when the
    # producer can fuse the cast (v5e HBM-bound win).

    tgt = target.reshape(n_img, hw).astype(jnp.int32)
    total_elems = n_img * hw

    g = -(-hw // LANE)
    # Tiny-spatial inputs: fold the image axis into the pixel axis so tiles
    # reach full (8, 128) sublane occupancy and the grid stays short.  The
    # large-spatial path below never transposes.
    if g < 8 and n_img > 1:
        lg = jnp.transpose(lg, (1, 0, 2)).reshape(1, num_class, n_img * hw)
        tgt = tgt.reshape(1, n_img * hw)
        hw = n_img * hw
        n_img = 1
        g = -(-hw // LANE)

    # Pad only the sub-128 pixel remainder.  Padded pixels carry
    # target == balance_index (never counted) and a large logit on the balance
    # channel, so their focal term underflows to exactly 0 -- no in-kernel
    # mask is needed for them.  (Assumes 0 <= balance_index < num_class, as in
    # the original module's configuration.)
    hw_pad = g * LANE
    if hw_pad != hw:
        pad = hw_pad - hw
        pad_logit = jnp.zeros((n_img, num_class, pad), lg.dtype)
        pad_logit = pad_logit.at[:, balance_index, :].set(
            jnp.asarray(50.0, lg.dtype))
        lg = jnp.concatenate([lg, pad_logit], axis=-1)
        tgt = jnp.concatenate(
            [tgt, jnp.full((n_img, pad), balance_index, jnp.int32)], axis=-1)

    lg4 = lg.reshape(n_img, num_class, g, LANE)      # (N, C, G, 128), free
    tg3 = tgt.reshape(n_img, g, LANE)                # (N, G, 128), free

    # ---- pixel-group tiling -------------------------------------------------
    ts_max = max(8, (ts_max // 8) * 8)
    itemsize = jnp.dtype(lg.dtype).itemsize
    # Double-buffered logits + targets + ~16 f32 temporaries per pixel slot.
    per_row_bytes = (2 * num_class * itemsize + 2 * 4 + 16 * 4) * LANE
    while ts_max > 8 and ts_max * per_row_bytes > 12 * 2**20:
        ts_max = max(8, ((ts_max // 2) // 8) * 8)

    if g <= ts_max:
        ts, num_j = g, 1                              # one full tile per image
    else:
        num_j = -(-g // ts_max)
        per_tile = -(-g // num_j)                     # balanced tiles
        ts = -(-per_tile // 8) * 8                    # multiple of 8, <= ts_max
    partial_last = (num_j * ts != g)

    kernel = functools.partial(
        _focal_kernel, num_class=num_class, gamma=gamma,
        balance_index=balance_index, g=g, ts=ts, partial_last=partial_last)

    vmem_bytes = int(ts * per_row_bytes + (2 << 20))
    vmem_bytes = min(max(vmem_bytes, 16 * 2**20), 48 * 2**20)

    loss_img, cnt_img = pl.pallas_call(
        kernel,
        out_shape=(jax.ShapeDtypeStruct((n_img, 8, LANE), jnp.float32),
                   jax.ShapeDtypeStruct((n_img, 8, LANE), jnp.float32)),
        grid_spec=pltpu.PrefetchScalarGridSpec(
            num_scalar_prefetch=0,
            grid=(n_img, num_j),
            in_specs=[
                pl.BlockSpec((1, num_class, ts, LANE),
                             lambda n, j: (n, 0, j, 0)),
                pl.BlockSpec((1, ts, LANE), lambda n, j: (n, j, 0)),
            ],
            out_specs=[
                pl.BlockSpec((1, 8, LANE), lambda n, j: (n, 0, 0)),
                pl.BlockSpec((1, 8, LANE), lambda n, j: (n, 0, 0)),
            ],
        ),
        # Image axis: independent per-image output blocks -> "parallel", so
        # v7x's two TensorCores split it.  Pixel-tile axis feeds the resident
        # per-image accumulator -> "arbitrary".
        # TODO(synk): for n_img == 1 on v7x, 2-way-split the pixel axis into a
        # leading parallel axis with per-half output blocks summed in the
        # wrapper.
        compiler_params=pltpu.CompilerParams(
            dimension_semantics=("parallel", "arbitrary"),
            vmem_limit_bytes=vmem_bytes),
    )(lg4, tg3)

    loss_sum = jnp.sum(loss_img)
    pos_cnt = jnp.sum(cnt_img)

    if size_average:
        # PyTorch path: loss = loss.mean(); then loss = loss.sum() -> same scalar.
        return loss_sum / jnp.float32(total_elems)
    # default path: sum / (num_positive + 1e-10)
    return loss_sum / (pos_cnt + 1e-10)


def _reference(logit, target, gamma=GAMMA, balance_index=BALANCE_INDEX):
    """Pure-JAX reference mirroring the PyTorch forward."""
    n, c = logit.shape[0], logit.shape[1]
    x = jnp.transpose(logit.reshape(n, c, -1), (0, 2, 1)).reshape(-1, c)
    x = x.astype(jnp.float32)
    t = target.reshape(-1).astype(jnp.int32)
    logp = jax.nn.log_softmax(x, axis=-1)
    logp_t = jnp.take_along_axis(logp, t[:, None], axis=-1)[:, 0]
    ce = -logp_t
    pt = jnp.exp(logp_t)
    loss = jnp.power(1.0 - pt, gamma) * ce
    num_pos = jnp.sum((t != balance_index).astype(jnp.float32))
    return jnp.sum(loss) / (num_pos + 1e-10)


if __name__ == "__main__":
    key = jax.random.PRNGKey(0)
    k1, k2 = jax.random.split(key)

    N, C, H, W = 2, 4, 16, 16
    logit = jax.random.normal(k1, (N, C, H, W), dtype=jnp.float32)
    target = jax.random.randint(k2, (N, 1, H, W), 0, C, dtype=jnp.int32)

    out = jax.block_until_ready(focal_loss_custom(logit, target))
    ref = jax.block_until_ready(_reference(logit, target))

    # Exact softmax path (pt = exp(-ce)) -> tight tolerance.
    assert jnp.allclose(out, ref, rtol=1e-4, atol=1e-6), (out, ref)
    print("KERNEL_OK")
</pallas_src>

<mosaic_0001>
module attributes {stable_mosaic.version = 11 : i64} {
  func.func @_focal_kernel(%arg0: i32, %arg1: i32, %arg2: memref<1x4x4x128xf32, #tpu.memory_space<vmem>>, %arg3: memref<1x4x128xi32, #tpu.memory_space<vmem>>, %arg4: memref<1x8x128xf32, #tpu.memory_space<vmem>>, %arg5: memref<1x8x128xf32, #tpu.memory_space<vmem>>) attributes {dimension_semantics = [#tpu.dimension_semantics<parallel>, #tpu.dimension_semantics<arbitrary>], iteration_bounds = array<i64: 1, 1>, scalar_prefetch = 0 : i64, scratch_operands = 0 : i64, tpu.core_type = #tpu.core_type<tc>, window_params = [{transform_indices = @transform_0, window_bounds = array<i64: 1, 4, 4, 128>}, {transform_indices = @transform_1, window_bounds = array<i64: 1, 4, 128>}, {transform_indices = @transform_2, window_bounds = array<i64: 1, 8, 128>}, {transform_indices = @transform_3, window_bounds = array<i64: 1, 8, 128>}]} {
    %c0_i32 = arith.constant 0 : i32
    %0 = arith.cmpi eq, %arg1, %c0_i32 : i32
    %1 = arith.extui %0 : i1 to i32
    %c0_i32_0 = arith.constant 0 : i32
    %2 = arith.cmpi ne, %1, %c0_i32_0 : i32
    scf.if %2 {
      %cst_35 = arith.constant 0.000000e+00 : f32
      %72 = vector.broadcast %cst_35 : f32 to vector<1x8x128xf32>
      %c0_36 = arith.constant 0 : index
      %c0_37 = arith.constant 0 : index
      %c0_38 = arith.constant 0 : index
      %73 = vector.load %arg4[%c0_36, %c0_37, %c0_38] : memref<1x8x128xf32, #tpu.memory_space<vmem>>, vector<1x8x128xf32>
      tpu.vector_store %arg4[%c0_36, %c0_37, %c0_38], %72 {strides = array<i32>} : memref<1x8x128xf32, #tpu.memory_space<vmem>>, vector<1x8x128xf32>,
      %cst_39 = arith.constant 0.000000e+00 : f32
      %74 = vector.broadcast %cst_39 : f32 to vector<1x8x128xf32>
      %c0_40 = arith.constant 0 : index
      %c0_41 = arith.constant 0 : index
      %c0_42 = arith.constant 0 : index
      %75 = vector.load %arg5[%c0_40, %c0_41, %c0_42] : memref<1x8x128xf32, #tpu.memory_space<vmem>>, vector<1x8x128xf32>
      tpu.vector_store %arg5[%c0_40, %c0_41, %c0_42], %74 {strides = array<i32>} : memref<1x8x128xf32, #tpu.memory_space<vmem>>, vector<1x8x128xf32>,
    } else {
    }
    %c0 = arith.constant 0 : index
    %c0_1 = arith.constant 0 : index
    %c0_2 = arith.constant 0 : index
    %c0_3 = arith.constant 0 : index
    %3 = vector.load %arg2[%c0, %c0_1, %c0_2, %c0_3] : memref<1x4x4x128xf32, #tpu.memory_space<vmem>>, vector<1x1x4x128xf32>
    %4 = vector.shape_cast %3 : vector<1x1x4x128xf32> to vector<4x128xf32>
    %c0_4 = arith.constant 0 : index
    %c1 = arith.constant 1 : index
    %c0_5 = arith.constant 0 : index
    %c0_6 = arith.constant 0 : index
    %5 = vector.load %arg2[%c0_4, %c1, %c0_5, %c0_6] : memref<1x4x4x128xf32, #tpu.memory_space<vmem>>, vector<1x1x4x128xf32>
    %6 = vector.shape_cast %5 : vector<1x1x4x128xf32> to vector<4x128xf32>
    %c0_7 = arith.constant 0 : index
    %c2 = arith.constant 2 : index
    %c0_8 = arith.constant 0 : index
    %c0_9 = arith.constant 0 : index
    %7 = vector.load %arg2[%c0_7, %c2, %c0_8, %c0_9] : memref<1x4x4x128xf32, #tpu.memory_space<vmem>>, vector<1x1x4x128xf32>
    %8 = vector.shape_cast %7 : vector<1x1x4x128xf32> to vector<4x128xf32>
    %c0_10 = arith.constant 0 : index
    %c3 = arith.constant 3 : index
    %c0_11 = arith.constant 0 : index
    %c0_12 = arith.constant 0 : index
    %9 = vector.load %arg2[%c0_10, %c3, %c0_11, %c0_12] : memref<1x4x4x128xf32, #tpu.memory_space<vmem>>, vector<1x1x4x128xf32>
    %10 = vector.shape_cast %9 : vector<1x1x4x128xf32> to vector<4x128xf32>
    %11 = arith.maximumf %4, %6 : vector<4x128xf32>
    %12 = arith.maximumf %11, %8 : vector<4x128xf32>
    %13 = arith.maximumf %12, %10 : vector<4x128xf32>
    %c0_13 = arith.constant 0 : index
    %c0_14 = arith.constant 0 : index
    %c0_15 = arith.constant 0 : index
    %14 = vector.load %arg3[%c0_13, %c0_14, %c0_15] : memref<1x4x128xi32, #tpu.memory_space<vmem>>, vector<1x4x128xi32>
    %15 = vector.shape_cast %14 : vector<1x4x128xi32> to vector<4x128xi32>
    %cst = arith.constant 0.000000e+00 : f32
    %16 = vector.broadcast %cst : f32 to vector<4x128xf32>
    %17 = arith.subf %4, %13 : vector<4x128xf32>
    %18 = math.exp %17 : vector<4x128xf32>
    %c0_i32_16 = arith.constant 0 : i32
    %19 = vector.broadcast %c0_i32_16 : i32 to vector<4x128xi32>
    %20 = arith.cmpi eq, %15, %19 : vector<4x128xi32>
    %21 = arith.select %20, %17, %16 : vector<4x128xi1>, vector<4x128xf32>
    %22 = arith.subf %6, %13 : vector<4x128xf32>
    %23 = math.exp %22 : vector<4x128xf32>
    %24 = arith.addf %18, %23 : vector<4x128xf32>
    %c1_i32 = arith.constant 1 : i32
    %25 = vector.broadcast %c1_i32 : i32 to vector<4x128xi32>
    %26 = arith.cmpi eq, %15, %25 : vector<4x128xi32>
    %27 = arith.select %26, %22, %21 : vector<4x128xi1>, vector<4x128xf32>
    %28 = arith.subf %8, %13 : vector<4x128xf32>
    %29 = math.exp %28 : vector<4x128xf32>
    %30 = arith.addf %24, %29 : vector<4x128xf32>
    %c2_i32 = arith.constant 2 : i32
    %31 = vector.broadcast %c2_i32 : i32 to vector<4x128xi32>
    %32 = arith.cmpi eq, %15, %31 : vector<4x128xi32>
    %33 = arith.select %32, %28, %27 : vector<4x128xi1>, vector<4x128xf32>
    %34 = arith.subf %10, %13 : vector<4x128xf32>
    %35 = math.exp %34 : vector<4x128xf32>
    %36 = arith.addf %30, %35 : vector<4x128xf32>
    %c3_i32 = arith.constant 3 : i32
    %37 = vector.broadcast %c3_i32 : i32 to vector<4x128xi32>
    %38 = arith.cmpi eq, %15, %37 : vector<4x128xi32>
    %39 = arith.select %38, %34, %33 : vector<4x128xi1>, vector<4x128xf32>
    %40 = math.log %36 : vector<4x128xf32>
    %41 = arith.subf %40, %39 : vector<4x128xf32>
    %cst_17 = arith.constant 0.000000e+00 : f32
    %42 = vector.broadcast %cst_17 : f32 to vector<4x128xf32>
    %43 = arith.subf %42, %41 : vector<4x128xf32>
    %44 = math.exp %43 : vector<4x128xf32>
    %cst_18 = arith.constant 1.000000e+00 : f32
    %45 = vector.broadcast %cst_18 : f32 to vector<4x128xf32>
    %46 = arith.subf %45, %44 : vector<4x128xf32>
    %cst_19 = arith.constant 0.000000e+00 : f32
    %47 = vector.broadcast %cst_19 : f32 to vector<4x128xf32>
    %48 = arith.maximumf %46, %47 : vector<4x128xf32>
    %49 = arith.mulf %48, %48 : vector<4x128xf32>
    %50 = arith.mulf %49, %49 : vector<4x128xf32>
    %51 = arith.mulf %48, %50 : vector<4x128xf32>
    %52 = math.sqrt %48 : vector<4x128xf32>
    %53 = arith.mulf %51, %52 : vector<4x128xf32>
    %54 = arith.mulf %53, %41 : vector<4x128xf32>
    %c2_i32_20 = arith.constant 2 : i32
    %55 = vector.broadcast %c2_i32_20 : i32 to vector<4x128xi32>
    %56 = arith.cmpi ne, %15, %55 : vector<4x128xi32>
    %cst_21 = arith.constant 1.000000e+00 : f32
    %cst_22 = arith.constant 0.000000e+00 : f32
    %57 = vector.broadcast %cst_21 : f32 to vector<4x128xf32>
    %58 = vector.broadcast %cst_22 : f32 to vector<4x128xf32>
    %59 = arith.select %56, %57, %58 : vector<4x128xi1>, vector<4x128xf32>
    %c0_23 = arith.constant 0 : index
    %c0_24 = arith.constant 0 : index
    %c0_25 = arith.constant 0 : index
    %60 = vector.load %arg4[%c0_23, %c0_24, %c0_25] : memref<1x8x128xf32, #tpu.memory_space<vmem>>, vector<1x4x128xf32>
    %61 = vector.shape_cast %60 : vector<1x4x128xf32> to vector<4x128xf32>
    %62 = arith.addf %61, %54 : vector<4x128xf32>
    %c0_26 = arith.constant 0 : index
    %c0_27 = arith.constant 0 : index
    %c0_28 = arith.constant 0 : index
    %63 = vector.load %arg4[%c0_26, %c0_27, %c0_28] : memref<1x8x128xf32, #tpu.memory_space<vmem>>, vector<1x4x128xf32>
    %64 = vector.shape_cast %63 : vector<1x4x128xf32> to vector<4x128xf32>
    %65 = vector.shape_cast %62 : vector<4x128xf32> to vector<1x4x128xf32>
    tpu.vector_store %arg4[%c0_26, %c0_27, %c0_28], %65 {strides = array<i32>} : memref<1x8x128xf32, #tpu.memory_space<vmem>>, vector<1x4x128xf32>,
    %c0_29 = arith.constant 0 : index
    %c0_30 = arith.constant 0 : index
    %c0_31 = arith.constant 0 : index
    %66 = vector.load %arg5[%c0_29, %c0_30, %c0_31] : memref<1x8x128xf32, #tpu.memory_space<vmem>>, vector<1x4x128xf32>
    %67 = vector.shape_cast %66 : vector<1x4x128xf32> to vector<4x128xf32>
    %68 = arith.addf %67, %59 : vector<4x128xf32>
    %c0_32 = arith.constant 0 : index
    %c0_33 = arith.constant 0 : index
    %c0_34 = arith.constant 0 : index
    %69 = vector.load %arg5[%c0_32, %c0_33, %c0_34] : memref<1x8x128xf32, #tpu.memory_space<vmem>>, vector<1x4x128xf32>
    %70 = vector.shape_cast %69 : vector<1x4x128xf32> to vector<4x128xf32>
    %71 = vector.shape_cast %68 : vector<4x128xf32> to vector<1x4x128xf32>
    tpu.vector_store %arg5[%c0_32, %c0_33, %c0_34], %71 {strides = array<i32>} : memref<1x8x128xf32, #tpu.memory_space<vmem>>, vector<1x4x128xf32>,
    return
  }
  func.func @transform_0(%arg0: i32, %arg1: i32) -> (i32, i32, i32, i32) {
    %c0_i32 = arith.constant 0 : i32
    %c0_i32_0 = arith.constant 0 : i32
    %c0_i32_1 = arith.constant 0 : i32
    return %arg0, %c0_i32, %arg1, %c0_i32_0 : i32, i32, i32, i32
  }
  func.func @transform_1(%arg0: i32, %arg1: i32) -> (i32, i32, i32) {
    %c0_i32 = arith.constant 0 : i32
    %c0_i32_0 = arith.constant 0 : i32
    return %arg0, %arg1, %c0_i32 : i32, i32, i32
  }
  func.func @transform_2(%arg0: i32, %arg1: i32) -> (i32, i32, i32) {
    %c0_i32 = arith.constant 0 : i32
    %c0_i32_0 = arith.constant 0 : i32
    %c0_i32_1 = arith.constant 0 : i32
    return %arg0, %c0_i32, %c0_i32_0 : i32, i32, i32
  }
  func.func @transform_3(%arg0: i32, %arg1: i32) -> (i32, i32, i32) {
    %c0_i32 = arith.constant 0 : i32
    %c0_i32_0 = arith.constant 0 : i32
    %c0_i32_1 = arith.constant 0 : i32
    return %arg0, %c0_i32, %c0_i32_0 : i32, i32, i32
  }
}

</mosaic_0001>

<llo_original>
// kernel: tpu_custom_call.1
$region0: #{tpu_custom_call.1}
  #allocation0 [shape = 'u32[]', space=smem, size = 0x4, offset = 0x4, fixed_abs, tag = 'smem constant byte address 0x4 - core index']
  #allocation1 [shape = 'u32[144,128]{1,0:T(1,128)}', space=vmem, size = 0x12000, scoped, tag = 'internal scratch']
  %s0 = inlined_call_operand.hbm [shape: f32[1,4,4,128], index: 0, kind: input, shape index: {}]
  %s1 = inlined_call_operand.hbm [shape: s32[1,4,128], index: 1, kind: input, shape index: {}]
  %s2 = inlined_call_operand.hbm [shape: f32[1,8,128], index: 2, kind: output, shape index: {0}]
  %s3 = inlined_call_operand.hbm [shape: f32[1,8,128], index: 3, kind: output, shape index: {1}]
  %4 = xla_tuple %s2, %s3
  %s5 = sld [smem:[#allocation0]]
  $region38: #{tpu_custom_call.1} parent=0
    _
  %s7 = ssub.s32 1, %s5
  %s8 = scalar_select 0, %s7, %s5
  $region1: #{tpu_custom_call.1} parent=0
    #allocation2 [shape = 'u8[8192]{0}', space=vmem, size = 0x2000, scoped, tag = 'input window, operand 0, single buffered']
    #allocation3 [shape = 's32[1]{0}', space=sflag, size = 0x4, scoped, tag = 'scoped memory for tpu_custom_call.1']
    #allocation4 [shape = 's32[1]{0}', space=sflag, size = 0x4, scoped, tag = 'scoped memory for tpu_custom_call.1']
    #allocation5 [shape = 'u8[2048]{0}', space=vmem, size = 0x800, scoped, tag = 'input window, operand 1, single buffered']
    #allocation6 [shape = 's32[1]{0}', space=sflag, size = 0x4, scoped, tag = 'scoped memory for tpu_custom_call.1']
    #allocation7 [shape = 'u8[4096]{0}', space=vmem, size = 0x1000, scoped, tag = 'output window, operand 0, single buffered']
    #allocation8 [shape = 'u8[4096]{0}', space=vmem, size = 0x1000, scoped, tag = 'output window, operand 1, single buffered']
    #allocation9 [shape = 's32[1]{0}', space=sflag, size = 0x4, scoped, tag = 'scoped memory for tpu_custom_call.1']
    %9 = vsyncpa [#allocation3], 0
    %10 = vsyncpa [#allocation6], 0
    %11 = vsyncpa [#allocation4], 0
    %12 = vsyncpa [#allocation9], 0
    // Predicated region
    $region2: #{tpu_custom_call.1} parent=1 // pred_check
      _
    $region3: #{tpu_custom_call.1} parent=1 // pred_check_branch
      %14 = sbr.rel (0) target = $region5
    $region4: #{tpu_custom_call.1} parent=1 // pred_region
      %s16 = ssub.s32 256, 256
      %17 = vsyncadd [#allocation3], %s16
      %s18 = sshll.u32 [#allocation2], 4
      %s19 = int_to_ptr.vmem [resolvable:$true] %s18
      %24 = dma.hbm_to_vmem [thread:$0]  %s0, 256, %s19, [#allocation3], 64, 64, 4
    $region5: #{tpu_custom_call.1} parent=1 // pred_fallthru
      _
    // Predicated region
    $region6: #{tpu_custom_call.1} parent=1 // pred_check
      _
    $region7: #{tpu_custom_call.1} parent=1 // pred_check_branch
      %26 = sbr.rel (0) target = $region9
    $region8: #{tpu_custom_call.1} parent=1 // pred_region
      %s28 = ssub.s32 64, 64
      %29 = vsyncadd [#allocation6], %s28
      %s31 = sshll.u32 [#allocation5], 4
      %s32 = int_to_ptr.vmem [resolvable:$true] %s31
      %34 = dma.hbm_to_vmem [thread:$0]  %s1, 64, %s32, [#allocation6]
    $region9: #{tpu_custom_call.1} parent=1 // pred_fallthru
      _
    // Predicated region
    $region10: #{tpu_custom_call.1} parent=1 // pred_check
      _
    $region11: #{tpu_custom_call.1} parent=1 // pred_check_branch
      %36 = sbr.rel (0) target = $region13
    $region12: #{tpu_custom_call.1} parent=1 // pred_region
      %37 = dma.done [#allocation3], 256
    $region13: #{tpu_custom_call.1} parent=1 // pred_fallthru
      _
    // Predicated region
    $region14: #{tpu_custom_call.1} parent=1 // pred_check
      _
    $region15: #{tpu_custom_call.1} parent=1 // pred_check_branch
      %39 = sbr.rel (0) target = $region17
    $region16: #{tpu_custom_call.1} parent=1 // pred_region
      %40 = dma.done [#allocation6], 64
    $region17: #{tpu_custom_call.1} parent=1 // pred_fallthru
      _
    %p41 = scmp.eq.s32.totalorder 0, 0
    // Predicated region
    $region18: #{tpu_custom_call.1} parent=1 // pred_check
      %p42 = pneg %p41
    $region19: #{tpu_custom_call.1} parent=1 // pred_check_branch
      %44 = sbr.rel (%p42) target = $region21
    $region20: #{tpu_custom_call.1} parent=1 // pred_region
      %45 = vst [vmem:[#allocation7] sm:$0xff] 0.0
      %46 = vst [vmem:[#allocation8] sm:$0xff] 0.0
    $region21: #{tpu_custom_call.1} parent=1 // pred_fallthru
      _
    %v47 = vld [vmem:[#allocation2] sm:$0xf]
    %s48 = scalar_lea.vmem [#allocation2], 4
    %v49 = vld [vmem:[%s48] sm:$0xf]
    %s50 = scalar_lea.vmem [#allocation2], 8
    %v51 = vld [vmem:[%s50] sm:$0xf]
    %s52 = scalar_lea.vmem [#allocation2], 12
    %v53 = vld [vmem:[%s52] sm:$0xf]
    %v54 = vmax.f32 %v47, %v49
    %v55 = vmax.f32 %v54, %v51
    %v56 = vmax.f32 %v55, %v53
    %v57 = vld [vmem:[#allocation5] sm:$0xf]
    %v58 = vsub.f32 %v47, %v56
    %v59 = vmul.f32 %v58, 1.442695
    %v60 = vpow.pop %v59
    %vm61 = vcmp.eq.s32.totalorder %v57, 0
    %v62 = vsel %vm61, %v58, 0.0
    %v63 = vsub.f32 %v49, %v56
    %v64 = vmul.f32 %v63, 1.442695
    %v65 = vpow.pop %v64
    %v66 = vadd.f32 %v60, %v65
    %vm67 = vcmp.eq.s32.totalorder %v57, 1
    %v68 = vsel %vm67, %v63, %v62
    %v69 = vsub.f32 %v51, %v56
    %v70 = vmul.f32 %v69, 1.442695
    %v71 = vpow.pop %v70
    %v72 = vadd.f32 %v66, %v71
    %vm73 = vcmp.eq.s32.totalorder %v57, 2
    %v74 = vsel %vm73, %v69, %v68
    %v75 = vsub.f32 %v53, %v56
    %v76 = vmul.f32 %v75, 1.442695
    %v77 = vpow.pop %v76
    %v78 = vadd.f32 %v72, %v77
    %vm79 = vcmp.eq.s32.totalorder %v57, 3
    %v80 = vsel %vm79, %v75, %v74
    %v81 = vlog2.pop %v78
    %v82 = vmul.f32 %v81, 0.6931472
    %v83 = vsub.f32 %v82, %v80
    %v84 = vsub.f32 0.0, %v83
    %v85 = vmul.f32 %v84, 1.442695
    %v86 = vpow.pop %v85
    %v87 = vsub.f32 1.0, %v86
    %v88 = vmax.f32 %v87, 0.0
    %v89 = vmul.f32 %v88, %v88
    %v90 = vmul.f32 %v89, %v89
    %v91 = vmul.f32 %v88, %v90
    %v92 = vrsqrt.pop %v88
    %v93 = vmul.f32 %v88, %v92
    %vm94 = vcmp.eq.f32.partialorder %v88, inf
    %v95 = vsel %vm94, %v88, %v93
    %vm96 = vcmp.eq.f32.partialorder %v88, 0.0
    %v97 = vand.u32 %v88, 2147483648
    %v98 = vsel %vm96, %v97, %v95
    %v99 = vmul.f32 %v91, %v98
    %v100 = vmul.f32 %v99, %v83
    %vm101 = vcmp.ne.s32.totalorder %v57, 2
    %v102 = vsel %vm101, 1.0, 0.0
    %v103 = vld [vmem:[#allocation7] sm:$0xf]
    %v104 = vadd.f32 %v103, %v100
    %105 = vst [vmem:[#allocation7] sm:$0xf] %v104
    %v106 = vld [vmem:[#allocation8] sm:$0xf]
    %v107 = vadd.f32 %v106, %v102
    %108 = vst [vmem:[#allocation8] sm:$0xf] %v107
    // Predicated region
    $region22: #{tpu_custom_call.1} parent=1 // pred_check
      _
    $region23: #{tpu_custom_call.1} parent=1 // pred_check_branch
      %110 = sbr.rel (0) target = $region25
    $region24: #{tpu_custom_call.1} parent=1 // pred_region
      %s112 = ssub.s32 128, 128
      %113 = vsyncadd [#allocation4], %s112
      %s115 = sshll.u32 [#allocation7], 4
      %s116 = int_to_ptr.vmem [resolvable:$true] %s115
      %118 = dma.vmem_to_hbm [thread:$0]  %s116, 128, %s2, [#allocation4]
    $region25: #{tpu_custom_call.1} parent=1 // pred_fallthru
      _
    // Predicated region
    $region26: #{tpu_custom_call.1} parent=1 // pred_check
      _
    $region27: #{tpu_custom_call.1} parent=1 // pred_check_branch
      %120 = sbr.rel (0) target = $region29
    $region28: #{tpu_custom_call.1} parent=1 // pred_region
      %s122 = ssub.s32 128, 128
      %123 = vsyncadd [#allocation9], %s122
      %s125 = sshll.u32 [#allocation8], 4
      %s126 = int_to_ptr.vmem [resolvable:$true] %s125
      %128 = dma.vmem_to_hbm [thread:$0]  %s126, 128, %s3, [#allocation9]
    $region29: #{tpu_custom_call.1} parent=1 // pred_fallthru
      _
    // Predicated region
    $region30: #{tpu_custom_call.1} parent=1 // pred_check
      _
    $region31: #{tpu_custom_call.1} parent=1 // pred_check_branch
      %130 = sbr.rel (0) target = $region33
    $region32: #{tpu_custom_call.1} parent=1 // pred_region
      %131 = dma.done [#allocation4], 128
    $region33: #{tpu_custom_call.1} parent=1 // pred_fallthru
      _
    // Predicated region
    $region34: #{tpu_custom_call.1} parent=1 // pred_check
      _
    $region35: #{tpu_custom_call.1} parent=1 // pred_check_branch
      %133 = sbr.rel (0) target = $region37
    $region36: #{tpu_custom_call.1} parent=1 // pred_region
      %134 = dma.done [#allocation9], 128
    $region37: #{tpu_custom_call.1} parent=1 // pred_fallthru
      _
    %135 = vsyncpa [#allocation3], 1
    %136 = vsyncpa [#allocation6], 1
    %137 = vsyncpa [#allocation4], 1
    %138 = vsyncpa [#allocation9], 1

</llo_original>
